<compile_context>
chip_gen: v7x
topology: tpu7x:2x2x1
jax: 0.10.0
libtpu: 0.0.40
codegen_flags: <defaults>
</compile_context>

<pallas_src>
import math

import jax
import jax.numpy as jnp
from jax.experimental import pallas as pl
from jax.experimental.pallas import tpu as pltpu

_LANE = 128
_SUBLANE = 8
# ~2 MiB per x block -> ~8 MiB for double-buffered input+output; fits the
# scoped-VMEM defaults on v5e (16 MiB), v6e (32 MiB) and v7x (32 MiB).
_TARGET_BLOCK_BYTES = 2 * 1024 * 1024
# Only bother forcing >=2 row-grid steps (v7x megacore) for arrays at least
# this big; below it the ~0.35us/step overhead outweighs any split benefit.
_MEGACORE_MIN_BYTES = 512 * 1024


def _dyt_affine_kernel(alpha_ref, w_ref, b_ref, x_ref, o_ref):
    # alpha_ref: SMEM (1,); w_ref/b_ref: (1, tH); x_ref/o_ref: (tr, tH).
    a = alpha_ref[0]
    x = x_ref[...].astype(jnp.float32)
    w = w_ref[...].astype(jnp.float32)
    b = b_ref[...].astype(jnp.float32)
    o_ref[...] = (w * jnp.tanh(a * x) + b).astype(o_ref.dtype)


def _dyt_plain_kernel(alpha_ref, x_ref, o_ref):
    a = alpha_ref[0]
    x = x_ref[...].astype(jnp.float32)
    o_ref[...] = jnp.tanh(a * x).astype(o_ref.dtype)


def _pick_lane_tile(width, max_tile=512):
    """Largest multiple-of-128 divisor of `width` <= max_tile; else full width."""
    if width % _LANE != 0:
        return width  # full extent (sub-128 fallback; correct, just slower)
    t = min(max_tile, width)
    t = (t // _LANE) * _LANE
    while t >= _LANE:
        if width % t == 0:
            return t
        t -= _LANE
    return width


def _pick_row_tile(rows, lane_tile, itemsize):
    """Multiple-of-8 row tile sized so the x block is ~_TARGET_BLOCK_BYTES."""
    if rows < _SUBLANE:
        return rows  # full extent is the only legal option
    tr = _TARGET_BLOCK_BYTES // (lane_tile * itemsize)
    tr = max(_SUBLANE, (tr // _SUBLANE) * _SUBLANE)
    tr = min(tr, (rows // _SUBLANE) * _SUBLANE)
    # Keep >= 2 row-grid steps when the array is big enough for the v7x
    # megacore split to pay for the extra pipeline step.
    total_bytes = rows * lane_tile * itemsize
    if tr >= rows and rows >= 2 * _SUBLANE and total_bytes >= _MEGACORE_MIN_BYTES:
        half = -(-((rows + 1) // 2) // _SUBLANE) * _SUBLANE
        tr = min(half, (rows // _SUBLANE) * _SUBLANE)
    return tr


def dynamic_tanh(x, alpha, weight=None, bias=None):
    """DyT forward. x: (..., H). alpha: (1,). weight/bias: (H,) or None."""
    orig_shape = x.shape
    H = orig_shape[-1]
    rows = 1
    for d in orig_shape[:-1]:
        rows *= d
    total = rows * H

    elementwise_affine = (weight is not None) or (bias is not None)
    if elementwise_affine:
        if weight is None:
            weight = jnp.ones((H,), dtype=x.dtype)
        if bias is None:
            bias = jnp.zeros((H,), dtype=x.dtype)

    # ---- Lane-dense layout -------------------------------------------------
    # Fold k consecutive rows into the lane axis so the store slab is an
    # unmasked multiple of 128 lanes; weight/bias are tiled k times to match.
    k = 1
    if H % _LANE != 0:
        k_cand = _LANE // math.gcd(H, _LANE)
        if rows % k_cand == 0:
            k = k_cand

    if elementwise_affine or k > 1 or H % _LANE == 0:
        rows2 = rows // k
        width = H * k
    elif total % _LANE == 0:
        # Non-affine with awkward H: no per-feature params, so flatten the
        # whole tensor to a lane-dense, HBM-contiguous (N/128, 128) slab.
        rows2 = total // _LANE
        width = _LANE
    else:
        rows2 = rows
        width = H
    x2 = x.reshape(rows2, width)

    itemsize = jnp.dtype(x.dtype).itemsize
    t_lane = _pick_lane_tile(width)
    t_row = _pick_row_tile(rows2, t_lane, itemsize)
    grid = (pl.cdiv(rows2, t_row), width // t_lane)

    alpha_spec = pl.BlockSpec(memory_space=pltpu.MemorySpace.SMEM)
    x_spec = pl.BlockSpec((t_row, t_lane), lambda i, j: (i, j))
    o_spec = pl.BlockSpec((t_row, t_lane), lambda i, j: (i, j))
    compiler_params = pltpu.CompilerParams(
        dimension_semantics=("parallel", "parallel"),
        vmem_limit_bytes=32 * 1024 * 1024,
    )

    alpha32 = alpha.reshape(-1).astype(jnp.float32)

    if elementwise_affine:
        w2 = jnp.tile(weight.reshape(1, H), (1, k))
        b2 = jnp.tile(bias.reshape(1, H), (1, k))
        wb_spec = pl.BlockSpec((1, t_lane), lambda i, j: (0, j))
        out = pl.pallas_call(
            _dyt_affine_kernel,
            out_shape=jax.ShapeDtypeStruct((rows2, width), x.dtype),
            grid=grid,
            in_specs=[alpha_spec, wb_spec, wb_spec, x_spec],
            out_specs=o_spec,
            compiler_params=compiler_params,
        )(alpha32, w2, b2, x2)
    else:
        out = pl.pallas_call(
            _dyt_plain_kernel,
            out_shape=jax.ShapeDtypeStruct((rows2, width), x.dtype),
            grid=grid,
            in_specs=[alpha_spec, x_spec],
            out_specs=o_spec,
            compiler_params=compiler_params,
        )(alpha32, x2)

    return out.reshape(orig_shape)


if __name__ == "__main__":
    # Module config: normalized_shape = hidden = 32, elementwise_affine = True
    batch, seq, hidden = 2, 8, 32
    alpha_init_value = 0.5

    key = jax.random.PRNGKey(0)
    x = jax.random.normal(key, (batch, seq, hidden), dtype=jnp.float32)

    # Deterministic parameter init (matches nn.Module __init__).
    alpha = jnp.ones((1,), dtype=jnp.float32) * alpha_init_value
    weight = jnp.ones((hidden,), dtype=jnp.float32)
    bias = jnp.zeros((hidden,), dtype=jnp.float32)

    y = jax.block_until_ready(dynamic_tanh(x, alpha, weight, bias))
    y_ref = weight * jnp.tanh(alpha[0] * x) + bias
    assert y.shape == x.shape and y.dtype == x.dtype
    assert jnp.allclose(y, y_ref, atol=1e-5, rtol=1e-5)

    # Non-affine path (flattened lane-dense layout).
    y2 = jax.block_until_ready(dynamic_tanh(x, alpha))
    assert jnp.allclose(y2, jnp.tanh(alpha[0] * x), atol=1e-5, rtol=1e-5)

    # Fallback paths: H not foldable to a 128 multiple with these rows,
    # ragged row grid -- affine and non-affine.
    key2 = jax.random.PRNGKey(1)
    x3 = jax.random.normal(key2, (3, 7, 48), dtype=jnp.float32)
    w3 = jnp.linspace(0.5, 1.5, 48, dtype=jnp.float32)
    b3 = jnp.linspace(-0.1, 0.1, 48, dtype=jnp.float32)
    y3 = jax.block_until_ready(dynamic_tanh(x3, alpha, w3, b3))
    assert jnp.allclose(y3, w3 * jnp.tanh(alpha[0] * x3) + b3, atol=1e-5, rtol=1e-5)
    y3p = jax.block_until_ready(dynamic_tanh(x3, alpha))
    assert jnp.allclose(y3p, jnp.tanh(alpha[0] * x3), atol=1e-5, rtol=1e-5)

    # Transformer-ish shape: exercises lane tiling (1024 -> 512) and the
    # >=2-step row grid for megacore.
    key3 = jax.random.PRNGKey(2)
    x4 = jax.random.normal(key3, (2, 128, 1024), dtype=jnp.float32)
    w4 = jnp.linspace(0.9, 1.1, 1024, dtype=jnp.float32)
    b4 = jnp.linspace(-0.05, 0.05, 1024, dtype=jnp.float32)
    y4 = jax.block_until_ready(dynamic_tanh(x4, alpha, w4, b4))
    assert jnp.allclose(y4, w4 * jnp.tanh(alpha[0] * x4) + b4, atol=1e-5, rtol=1e-5)

    print("KERNEL_OK")
</pallas_src>

<mosaic_0001>
module attributes {stable_mosaic.version = 11 : i64} {
  func.func @_dyt_affine_kernel(%arg0: i32, %arg1: i32, %arg2: memref<1xf32, #tpu.memory_space<smem>>, %arg3: memref<1x128xf32, #tpu.memory_space<vmem>>, %arg4: memref<1x128xf32, #tpu.memory_space<vmem>>, %arg5: memref<4x128xf32, #tpu.memory_space<vmem>>, %arg6: memref<4x128xf32, #tpu.memory_space<vmem>>) attributes {dimension_semantics = [#tpu.dimension_semantics<parallel>, #tpu.dimension_semantics<parallel>], iteration_bounds = array<i64: 1, 1>, scalar_prefetch = 0 : i64, scratch_operands = 0 : i64, tpu.core_type = #tpu.core_type<tc>, window_params = [{transform_indices = @transform_0, window_bounds = array<i64: 1>}, {transform_indices = @transform_1, window_bounds = array<i64: 1, 128>}, {transform_indices = @transform_2, window_bounds = array<i64: 1, 128>}, {transform_indices = @transform_3, window_bounds = array<i64: 4, 128>}, {transform_indices = @transform_4, window_bounds = array<i64: 4, 128>}]} {
    %c0 = arith.constant 0 : index
    %0 = memref.load %arg2[%c0] : memref<1xf32, #tpu.memory_space<smem>>
    %c0_0 = arith.constant 0 : index
    %c0_1 = arith.constant 0 : index
    %1 = vector.load %arg5[%c0_0, %c0_1] : memref<4x128xf32, #tpu.memory_space<vmem>>, vector<4x128xf32>
    %c0_2 = arith.constant 0 : index
    %c0_3 = arith.constant 0 : index
    %2 = vector.load %arg3[%c0_2, %c0_3] : memref<1x128xf32, #tpu.memory_space<vmem>>, vector<1x128xf32>
    %c0_4 = arith.constant 0 : index
    %c0_5 = arith.constant 0 : index
    %3 = vector.load %arg4[%c0_4, %c0_5] : memref<1x128xf32, #tpu.memory_space<vmem>>, vector<1x128xf32>
    %4 = vector.broadcast %0 : f32 to vector<4x128xf32>
    %5 = arith.mulf %4, %1 : vector<4x128xf32>
    %6 = math.tanh %5 : vector<4x128xf32>
    %7 = vector.broadcast %2 : vector<1x128xf32> to vector<4x128xf32>
    %8 = arith.mulf %7, %6 : vector<4x128xf32>
    %9 = vector.broadcast %3 : vector<1x128xf32> to vector<4x128xf32>
    %10 = arith.addf %8, %9 : vector<4x128xf32>
    %c0_6 = arith.constant 0 : index
    %c0_7 = arith.constant 0 : index
    %11 = vector.load %arg6[%c0_6, %c0_7] : memref<4x128xf32, #tpu.memory_space<vmem>>, vector<4x128xf32>
    tpu.vector_store %arg6[%c0_6, %c0_7], %10 {strides = array<i32>} : memref<4x128xf32, #tpu.memory_space<vmem>>, vector<4x128xf32>,
    return
  }
  func.func @transform_0(%arg0: i32, %arg1: i32) -> i32 {
    %c0_i32 = arith.constant 0 : i32
    %c0_i32_0 = arith.constant 0 : i32
    return %c0_i32 : i32
  }
  func.func @transform_1(%arg0: i32, %arg1: i32) -> (i32, i32) {
    %c0_i32 = arith.constant 0 : i32
    %c0_i32_0 = arith.constant 0 : i32
    return %c0_i32, %arg1 : i32, i32
  }
  func.func @transform_2(%arg0: i32, %arg1: i32) -> (i32, i32) {
    %c0_i32 = arith.constant 0 : i32
    %c0_i32_0 = arith.constant 0 : i32
    return %c0_i32, %arg1 : i32, i32
  }
  func.func @transform_3(%arg0: i32, %arg1: i32) -> (i32, i32) {
    %c0_i32 = arith.constant 0 : i32
    return %arg0, %arg1 : i32, i32
  }
  func.func @transform_4(%arg0: i32, %arg1: i32) -> (i32, i32) {
    %c0_i32 = arith.constant 0 : i32
    return %arg0, %arg1 : i32, i32
  }
}

</mosaic_0001>

<llo_original>
// kernel: tpu_custom_call.1
$region0: #{tpu_custom_call.1}
  #allocation0 [shape = 'u32[]', space=smem, size = 0x4, offset = 0x4, fixed_abs, tag = 'smem constant byte address 0x4 - core index']
  #allocation1 [shape = 'u32[144,128]{1,0:T(1,128)}', space=vmem, size = 0x12000, scoped, tag = 'internal scratch']
  #allocation2 [shape = 'f32[1]{0:T(128)S(6)}', space=smem, size = 0x200, scoped, tag = 'scoped memory for tpu_custom_call.1']
  %s0 = inlined_call_operand.<no memory space> [shape: f32[1], index: 0, kind: input, shape index: {}]
  %s1 = inlined_call_operand.vmem [shape: f32[1,128], index: 1, kind: input, shape index: {}]
  %s2 = inlined_call_operand.vmem [shape: f32[1,128], index: 2, kind: input, shape index: {}]
  %s3 = inlined_call_operand.vmem [shape: f32[4,128], index: 3, kind: input, shape index: {}]
  %s4 = inlined_call_operand.hbm [shape: f32[4,128], index: 4, kind: output, shape index: {}]
  %s5 = sld [smem:[#allocation0]]
  $region26: #{tpu_custom_call.1} parent=0
    _
  %s7 = ssub.s32 1, %s5
  %s8 = scalar_select 0, %s7, %s5
  %9 = sst [smem:[#allocation2]] %s0
  $region1: #{tpu_custom_call.1} parent=0
    #allocation3 [shape = 'u8[2048]{0}', space=vmem, size = 0x800, scoped, tag = 'output window, operand 0, single buffered']
    #allocation4 [shape = 's32[1]{0}', space=sflag, size = 0x4, scoped, tag = 'scoped memory for tpu_custom_call.1']
    %10 = vsyncpa [#allocation4], 0
    // Predicated region
    $region2: #{tpu_custom_call.1} parent=1 // pred_check
      _
    $region3: #{tpu_custom_call.1} parent=1 // pred_check_branch
      %12 = sbr.rel (0) target = $region5
    $region4: #{tpu_custom_call.1} parent=1 // pred_region
      _
    $region5: #{tpu_custom_call.1} parent=1 // pred_fallthru
      _
    // Predicated region
    $region6: #{tpu_custom_call.1} parent=1 // pred_check
      _
    $region7: #{tpu_custom_call.1} parent=1 // pred_check_branch
      %14 = sbr.rel (0) target = $region9
    $region8: #{tpu_custom_call.1} parent=1 // pred_region
      _
    $region9: #{tpu_custom_call.1} parent=1 // pred_fallthru
      _
    // Predicated region
    $region10: #{tpu_custom_call.1} parent=1 // pred_check
      _
    $region11: #{tpu_custom_call.1} parent=1 // pred_check_branch
      %16 = sbr.rel (0) target = $region13
    $region12: #{tpu_custom_call.1} parent=1 // pred_region
      _
    $region13: #{tpu_custom_call.1} parent=1 // pred_fallthru
      _
    // Predicated region
    $region14: #{tpu_custom_call.1} parent=1 // pred_check
      _
    $region15: #{tpu_custom_call.1} parent=1 // pred_check_branch
      %18 = sbr.rel (0) target = $region17
    $region16: #{tpu_custom_call.1} parent=1 // pred_region
      _
    $region17: #{tpu_custom_call.1} parent=1 // pred_fallthru
      _
    %s19 = sld [smem:[#allocation2]]
    %v20 = vld [vmem:[%s3] sm:$0xf]
    %v21 = vld [vmem:[%s1] sm:$0x1]
    %v22 = vld [vmem:[%s2] sm:$0x1]
    %v23 = vstv %s19
    %v24 = vmul.f32 %v23, %v20
    %v25 = vtanh.pop %v24
    %v27 = vlaneseq
    %v28 = vshrl.u32 %v27, 7
    %v29 = vsub.s32 0, %v28
    %v30 = vrot.slane %v21, %v29
    %v32 = vmul.f32 %v30, %v25
    %v34 = vlaneseq
    %v35 = vshrl.u32 %v34, 7
    %v36 = vsub.s32 0, %v35
    %v37 = vrot.slane %v22, %v36
    %v39 = vadd.f32 %v32, %v37
    %40 = vst [vmem:[#allocation3] sm:$0xf] %v39
    // Predicated region
    $region18: #{tpu_custom_call.1} parent=1 // pred_check
      _
    $region19: #{tpu_custom_call.1} parent=1 // pred_check_branch
      %42 = sbr.rel (0) target = $region21
    $region20: #{tpu_custom_call.1} parent=1 // pred_region
      %s44 = ssub.s32 64, 64
      %45 = vsyncadd [#allocation4], %s44
      %s47 = sshll.u32 [#allocation3], 4
      %s48 = int_to_ptr.vmem [resolvable:$true] %s47
      %50 = dma.vmem_to_hbm [thread:$0]  %s48, 64, %s4, [#allocation4]
    $region21: #{tpu_custom_call.1} parent=1 // pred_fallthru
      _
    // Predicated region
    $region22: #{tpu_custom_call.1} parent=1 // pred_check
      _
    $region23: #{tpu_custom_call.1} parent=1 // pred_check_branch
      %52 = sbr.rel (0) target = $region25
    $region24: #{tpu_custom_call.1} parent=1 // pred_region
      %53 = dma.done [#allocation4], 64
    $region25: #{tpu_custom_call.1} parent=1 // pred_fallthru
      _
    %54 = vsyncpa [#allocation4], 1

</llo_original>
